<compile_context>
chip_gen: v6e
topology: v6e:2x2x1
jax: 0.10.0
libtpu: 0.0.40
codegen_flags: <defaults>
</compile_context>

<pallas_src>
import functools

import jax
import jax.numpy as jnp
from jax.experimental import pallas as pl
from jax.experimental.pallas import tpu as pltpu
from jax.scipy.linalg import block_diag


def _rna_sqex_kernel(x_ref, w1_ref, b1_ref, w2_ref, b2_ref, out_ref, norm_ref,
                     *, num_modalities, input_dim):
    # x_ref : (B, M*D)      w1_ref: (M*D, M*H)   b1_ref: (1, M*H)
    # w2_ref: (M*H, M*D)    b2_ref: (1, M*D)
    # out_ref: (B, M*D)     norm_ref: (1, M)
    x = x_ref[...].astype(jnp.float32)                      # (B, M*D)

    # linear1 (all modalities fused via block-diagonal weights) + ReLU
    h = jnp.dot(x, w1_ref[...], preferred_element_type=jnp.float32) + b1_ref[...]
    h = jnp.maximum(h, 0.0)                                  # (B, M*H)

    # linear2 + Sigmoid
    y = jnp.dot(h, w2_ref[...], preferred_element_type=jnp.float32) + b2_ref[...]
    y = jax.nn.sigmoid(y)                                    # (B, M*D)

    out = x * y                                              # squeeze-excite gating
    out_ref[...] = out.astype(out_ref.dtype)                 # one lane-dense store

    # Per-modality mean (over batch) of the per-row L2 norm along the feature dim.
    sq = out * out
    inv_b = 1.0 / out.shape[0]
    per_mod = []
    for m in range(num_modalities):                          # static small loop
        lo = m * input_dim
        ss = jnp.sum(sq[:, lo:lo + input_dim], axis=-1, keepdims=True)  # (B, 1)
        per_mod.append(jnp.sqrt(ss))
    row_norms = jnp.concatenate(per_mod, axis=-1)            # (B, M)
    norm_ref[...] = jnp.sum(row_norms, axis=0, keepdims=True) * inv_b   # (1, M)


@functools.partial(jax.jit, static_argnames=("input_dim",))
def rna_block_forward(x, w1, b1, w2, b2, *, input_dim):
    """x: (B, M*input_dim); per-modality weights stacked along axis 0.

    w1: (M, H, D)  b1: (M, 1, H)  w2: (M, D, H)  b2: (M, 1, D)
    Returns (out (B, M*D), norms (M,)).
    """
    B = x.shape[0]
    M, H, D = w1.shape
    assert D == input_dim
    MD, MH = M * D, M * H

    # One-time tiny weight prep (outside the kernel): block-diagonal so all
    # modalities run as one contraction, and pre-transposed so the kernel
    # contracts LHS-last-dim against RHS-first-dim (no in-kernel transposes).
    w1bd_t = block_diag(*[w1[m] for m in range(M)]).T        # (M*D, M*H)
    w2bd_t = block_diag(*[w2[m] for m in range(M)]).T        # (M*H, M*D)
    b1_row = b1.reshape(1, MH)
    b2_row = b2.reshape(1, MD)

    kernel = functools.partial(_rna_sqex_kernel, num_modalities=M, input_dim=D)
    vmem_full = pl.BlockSpec(memory_space=pltpu.MemorySpace.VMEM)

    out, norms = pl.pallas_call(
        kernel,
        out_shape=(
            jax.ShapeDtypeStruct((B, MD), x.dtype),
            jax.ShapeDtypeStruct((1, M), jnp.float32),
        ),
        in_specs=[vmem_full] * 5,
        out_specs=(vmem_full, vmem_full),
        compiler_params=pltpu.CompilerParams(
            vmem_limit_bytes=32 * 1024 * 1024,
        ),
    )(x, w1bd_t, b1_row, w2bd_t, b2_row)

    return out, norms.reshape(M)


def _reference_forward(x, w1, b1, w2, b2, input_dim):
    """Pure-JAX reference mirroring the PyTorch forward (eval mode)."""
    M = w1.shape[0]
    chunks = jnp.split(x, M, axis=-1)
    outs, norms = [], []
    for m in range(M):
        xm = chunks[m]
        h = jnp.maximum(xm @ w1[m].T + b1[m, 0], 0.0)
        y = jax.nn.sigmoid(h @ w2[m].T + b2[m, 0])
        om = xm * y
        outs.append(om)
        norms.append(jnp.mean(jnp.linalg.norm(om, axis=-1)))
    return jnp.concatenate(outs, axis=-1), jnp.stack(norms)


if __name__ == "__main__":
    # Small shapes consistent with the module:
    #   modalities = ['rna', 'atac'], input_dim = 32 (divisible by reduction=16)
    B = 8
    M = 2                 # number of modalities
    D = 32                # input_dim (per-modality feature width)
    REDUCTION = 16
    H = D // REDUCTION    # hidden width of SqEx bottleneck

    key = jax.random.PRNGKey(0)
    kx, kw1, kb1, kw2, kb2 = jax.random.split(key, 5)

    x = jax.random.normal(kx, (B, M * D), dtype=jnp.float32)
    # Deterministic per-modality SqEx parameters (stacked along axis 0).
    w1 = 0.1 * jax.random.normal(kw1, (M, H, D), dtype=jnp.float32)   # linear1 weight
    b1 = 0.1 * jax.random.normal(kb1, (M, 1, H), dtype=jnp.float32)   # linear1 bias
    w2 = 0.1 * jax.random.normal(kw2, (M, D, H), dtype=jnp.float32)   # linear2 weight
    b2 = 0.1 * jax.random.normal(kb2, (M, 1, D), dtype=jnp.float32)   # linear2 bias

    out, norms = rna_block_forward(x, w1, b1, w2, b2, input_dim=D)
    out = jax.block_until_ready(out)
    norms = jax.block_until_ready(norms)

    ref_out, ref_norms = _reference_forward(x, w1, b1, w2, b2, D)
    assert out.shape == (B, M * D)
    assert norms.shape == (M,)
    assert jnp.allclose(out, ref_out, atol=1e-5, rtol=1e-5)
    assert jnp.allclose(norms, ref_norms, atol=1e-5, rtol=1e-5)

    print("KERNEL_OK")
</pallas_src>

<mosaic_0001>
module attributes {stable_mosaic.version = 11 : i64} {
  func.func @_rna_sqex_kernel(%arg0: memref<8x64xf32, #tpu.memory_space<vmem>>, %arg1: memref<64x4xf32, #tpu.memory_space<vmem>>, %arg2: memref<1x4xf32, #tpu.memory_space<vmem>>, %arg3: memref<4x64xf32, #tpu.memory_space<vmem>>, %arg4: memref<1x64xf32, #tpu.memory_space<vmem>>, %arg5: memref<8x64xf32, #tpu.memory_space<vmem>>, %arg6: memref<1x2xf32, #tpu.memory_space<vmem>>) attributes {dimension_semantics = [], scalar_prefetch = 0 : i64, scratch_operands = 0 : i64, tpu.core_type = #tpu.core_type<tc>} {
    %c0 = arith.constant 0 : index
    %c0_0 = arith.constant 0 : index
    %0 = vector.load %arg0[%c0, %c0_0] : memref<8x64xf32, #tpu.memory_space<vmem>>, vector<8x64xf32>
    %c0_1 = arith.constant 0 : index
    %c0_2 = arith.constant 0 : index
    %1 = vector.load %arg1[%c0_1, %c0_2] : memref<64x4xf32, #tpu.memory_space<vmem>>, vector<64x4xf32>
    %cst = arith.constant dense<0.000000e+00> : vector<8x4xf32>
    %2 = tpu.matmul %0, %1, %cst {dimension_numbers = #tpu.dot_dimension_numbers<[1], [0], [0], [1], [0, 0, 1, 1], [], []>} : vector<8x64xf32>, vector<64x4xf32>, vector<8x4xf32> -> vector<8x4xf32>
    %c0_3 = arith.constant 0 : index
    %c0_4 = arith.constant 0 : index
    %3 = vector.load %arg2[%c0_3, %c0_4] : memref<1x4xf32, #tpu.memory_space<vmem>>, vector<1x4xf32>
    %4 = vector.broadcast %3 : vector<1x4xf32> to vector<8x4xf32>
    %5 = arith.addf %2, %4 : vector<8x4xf32>
    %cst_5 = arith.constant 0.000000e+00 : f32
    %6 = vector.broadcast %cst_5 : f32 to vector<8x4xf32>
    %7 = arith.maximumf %5, %6 : vector<8x4xf32>
    %c0_6 = arith.constant 0 : index
    %c0_7 = arith.constant 0 : index
    %8 = vector.load %arg3[%c0_6, %c0_7] : memref<4x64xf32, #tpu.memory_space<vmem>>, vector<4x64xf32>
    %cst_8 = arith.constant dense<0.000000e+00> : vector<8x64xf32>
    %9 = tpu.matmul %7, %8, %cst_8 {dimension_numbers = #tpu.dot_dimension_numbers<[1], [0], [0], [1], [0, 0, 1, 1], [], []>} : vector<8x4xf32>, vector<4x64xf32>, vector<8x64xf32> -> vector<8x64xf32>
    %c0_9 = arith.constant 0 : index
    %c0_10 = arith.constant 0 : index
    %10 = vector.load %arg4[%c0_9, %c0_10] : memref<1x64xf32, #tpu.memory_space<vmem>>, vector<1x64xf32>
    %11 = vector.broadcast %10 : vector<1x64xf32> to vector<8x64xf32>
    %12 = arith.addf %9, %11 : vector<8x64xf32>
    %13 = arith.negf %12 : vector<8x64xf32>
    %14 = math.exp %13 : vector<8x64xf32>
    %cst_11 = arith.constant 1.000000e+00 : f32
    %15 = vector.broadcast %cst_11 : f32 to vector<8x64xf32>
    %16 = arith.addf %15, %14 : vector<8x64xf32>
    %17 = arith.divf %15, %16 : vector<8x64xf32>
    %18 = arith.mulf %0, %17 : vector<8x64xf32>
    %c0_12 = arith.constant 0 : index
    %c0_13 = arith.constant 0 : index
    %19 = vector.load %arg5[%c0_12, %c0_13] : memref<8x64xf32, #tpu.memory_space<vmem>>, vector<8x64xf32>
    tpu.vector_store %arg5[%c0_12, %c0_13], %18 {strides = array<i32>} : memref<8x64xf32, #tpu.memory_space<vmem>>, vector<8x64xf32>,
    %20 = arith.mulf %18, %18 : vector<8x64xf32>
    %21 = vector.extract_strided_slice %20 {offsets = [0, 0], sizes = [8, 32], strides = [1, 1]} : vector<8x64xf32> to vector<8x32xf32>
    %cst_14 = arith.constant dense<0.000000e+00> : vector<8xf32>
    %22 = vector.multi_reduction <add>, %21, %cst_14 [1] : vector<8x32xf32> to vector<8xf32>
    %23 = vector.shape_cast %22 : vector<8xf32> to vector<8x1xf32>
    %24 = math.sqrt %23 : vector<8x1xf32>
    %25 = vector.extract_strided_slice %20 {offsets = [0, 32], sizes = [8, 32], strides = [1, 1]} : vector<8x64xf32> to vector<8x32xf32>
    %cst_15 = arith.constant dense<0.000000e+00> : vector<8xf32>
    %26 = vector.multi_reduction <add>, %25, %cst_15 [1] : vector<8x32xf32> to vector<8xf32>
    %27 = vector.shape_cast %26 : vector<8xf32> to vector<8x1xf32>
    %28 = math.sqrt %27 : vector<8x1xf32>
    %29 = tpu.concatenate %24, %28 in 1 : vector<8x1xf32>, vector<8x1xf32> -> vector<8x2xf32>
    %cst_16 = arith.constant dense<0.000000e+00> : vector<2xf32>
    %30 = vector.multi_reduction <add>, %29, %cst_16 [0] : vector<8x2xf32> to vector<2xf32>
    %31 = vector.shape_cast %30 : vector<2xf32> to vector<1x2xf32>
    %cst_17 = arith.constant 1.250000e-01 : f32
    %32 = vector.broadcast %cst_17 : f32 to vector<1x2xf32>
    %33 = arith.mulf %31, %32 : vector<1x2xf32>
    %c0_18 = arith.constant 0 : index
    %c0_19 = arith.constant 0 : index
    %34 = vector.load %arg6[%c0_18, %c0_19] : memref<1x2xf32, #tpu.memory_space<vmem>>, vector<1x2xf32>
    tpu.vector_store %arg6[%c0_18, %c0_19], %33 {strides = array<i32>} : memref<1x2xf32, #tpu.memory_space<vmem>>, vector<1x2xf32>,
    return
  }
}

</mosaic_0001>

<llo_original>
// kernel: rna_block_forward.1
$region0: #{rna_block_forward.1}
  #allocation0 [shape = 'u32[]', space=smem, size = 0x4, offset = 0x4, fixed_abs, tag = 'smem constant byte address 0x4 - core index']
  #allocation1 [shape = 'u32[144,128]{1,0:T(1,128)}', space=vmem, size = 0x12000, scoped, tag = 'internal scratch']
  %s0 = inlined_call_operand.vmem [shape: f32[8,64], index: 0, kind: input, shape index: {}]
  %s1 = inlined_call_operand.vmem [shape: f32[64,4], index: 1, kind: input, shape index: {}]
  %s2 = inlined_call_operand.vmem [shape: f32[1,4], index: 2, kind: input, shape index: {}]
  %s3 = inlined_call_operand.vmem [shape: f32[4,64], index: 3, kind: input, shape index: {}]
  %s4 = inlined_call_operand.vmem [shape: f32[1,64], index: 4, kind: input, shape index: {}]
  %s5 = inlined_call_operand.hbm [shape: f32[8,64], index: 5, kind: output, shape index: {0}]
  %s6 = inlined_call_operand.hbm [shape: f32[1,2], index: 6, kind: output, shape index: {1}]
  %7 = xla_tuple %s5, %s6
  %s8 = sld [smem:[#allocation0]]
  $region38: #{rna_block_forward.1} parent=0
    _
  %s10 = ssub.s32 1, %s8
  %s11 = scalar_select 0, %s10, %s8
  $region1: #{rna_block_forward.1} parent=0
    #allocation2 [shape = 'u8[4096]{0}', space=vmem, size = 0x1000, scoped, tag = 'output window, operand 0, single buffered']
    #allocation3 [shape = 's32[1]{0}', space=sflag, size = 0x4, scoped, tag = 'scoped memory for rna_block_forward.1']
    #allocation4 [shape = 'u8[512]{0}', space=vmem, size = 0x400, scoped, tag = 'output window, operand 1, single buffered']
    #allocation5 [shape = 's32[1]{0}', space=sflag, size = 0x4, scoped, tag = 'scoped memory for rna_block_forward.1']
    %12 = vsyncpa [#allocation3], 0
    %13 = vsyncpa [#allocation5], 0
    // Predicated region
    $region2: #{rna_block_forward.1} parent=1 // pred_check
      _
    $region3: #{rna_block_forward.1} parent=1 // pred_check_branch
      %15 = sbr.rel (0) target = $region5
    $region4: #{rna_block_forward.1} parent=1 // pred_region
      _
    $region5: #{rna_block_forward.1} parent=1 // pred_fallthru
      _
    // Predicated region
    $region6: #{rna_block_forward.1} parent=1 // pred_check
      _
    $region7: #{rna_block_forward.1} parent=1 // pred_check_branch
      %17 = sbr.rel (0) target = $region9
    $region8: #{rna_block_forward.1} parent=1 // pred_region
      _
    $region9: #{rna_block_forward.1} parent=1 // pred_fallthru
      _
    // Predicated region
    $region10: #{rna_block_forward.1} parent=1 // pred_check
      _
    $region11: #{rna_block_forward.1} parent=1 // pred_check_branch
      %19 = sbr.rel (0) target = $region13
    $region12: #{rna_block_forward.1} parent=1 // pred_region
      _
    $region13: #{rna_block_forward.1} parent=1 // pred_fallthru
      _
    // Predicated region
    $region14: #{rna_block_forward.1} parent=1 // pred_check
      _
    $region15: #{rna_block_forward.1} parent=1 // pred_check_branch
      %21 = sbr.rel (0) target = $region17
    $region16: #{rna_block_forward.1} parent=1 // pred_region
      _
    $region17: #{rna_block_forward.1} parent=1 // pred_fallthru
      _
    // Predicated region
    $region18: #{rna_block_forward.1} parent=1 // pred_check
      _
    $region19: #{rna_block_forward.1} parent=1 // pred_check_branch
      %23 = sbr.rel (0) target = $region21
    $region20: #{rna_block_forward.1} parent=1 // pred_region
      _
    $region21: #{rna_block_forward.1} parent=1 // pred_fallthru
      _
    %v24 = vld [vmem:[%s0] sm:$0xff]
    %v25 = vld [vmem:[%s1] sm:$0xff]
    %v26 = vld [vmem:[%s1 + $0x8] sm:$0xff]
    %v27 = vld [vmem:[%s1 + $0x10] sm:$0xff]
    %v28 = vld [vmem:[%s1 + $0x18] sm:$0xff]
    %v29 = vld [vmem:[%s1 + $0x20] sm:$0xff]
    %v30 = vld [vmem:[%s1 + $0x28] sm:$0xff]
    %v31 = vld [vmem:[%s1 + $0x30] sm:$0xff]
    %v32 = vld [vmem:[%s1 + $0x38] sm:$0xff]
    %v33 = vld [vmem:[%s2] sm:$0x1]
    %v35 = vlaneseq
    %v36 = vshrl.u32 %v35, 7
    %v37 = vsub.s32 0, %v36
    %v38 = vrot.slane %v33, %v37
    %vm40 = vcmask 523264
    %v42 = vsel %vm40, %v24, 0
    %44 = vmatprep.subr.mxu0 0.0
    %45 = vmatpush1.msra.mxu0 0.0
    %46 = vmatprep.subr.mxu0 0.0
    %47 = vmatpush1.msra.mxu0 0.0
    %48 = vmatprep.subr.mxu0 0.0
    %49 = vmatpush1.msra.mxu0 0.0
    %50 = vmatprep.subr.mxu0 0.0
    %51 = vmatpush1.msra.mxu0 0.0
    %52 = vmatprep.subr.mxu0 0.0
    %53 = vmatpush1.msra.mxu0 0.0
    %54 = vmatprep.subr.mxu0 0.0
    %55 = vmatpush1.msra.mxu0 0.0
    %56 = vmatprep.subr.mxu0 0.0
    %57 = vmatpush1.msra.mxu0 0.0
    %58 = vmatprep.subr.mxu0 0.0
    %59 = vmatpush1.msra.mxu0 0.0
    %60 = vmatprep.subr.mxu0 0.0
    %61 = vmatpush1.msra.mxu0 %v32
    %62 = vmatprep.subr.mxu0 0.0
    %63 = vmatpush1.msra.mxu0 %v31
    %64 = vmatprep.subr.mxu0 0.0
    %65 = vmatpush1.msra.mxu0 %v30
    %66 = vmatprep.subr.mxu0 0.0
    %67 = vmatpush1.msra.mxu0 %v29
    %68 = vmatprep.subr.mxu0 0.0
    %69 = vmatpush1.msra.mxu0 %v28
    %70 = vmatprep.subr.mxu0 0.0
    %71 = vmatpush1.msra.mxu0 %v27
    %72 = vmatprep.subr.mxu0 0.0
    %73 = vmatpush1.msra.mxu0 %v26
    %74 = vmatprep.subr.mxu0 0.0
    %75 = vmatpush1.msra.mxu0 %v25
    %76 = vmatprep.subr.mxu0 0.0
    %77 = vmatpush2.msra.mxu0 0.0
    %78 = vmatprep.subr.mxu0 0.0
    %79 = vmatpush2.msra.mxu0 0.0
    %80 = vmatprep.subr.mxu0 0.0
    %81 = vmatpush2.msra.mxu0 0.0
    %82 = vmatprep.subr.mxu0 0.0
    %83 = vmatpush2.msra.mxu0 0.0
    %84 = vmatprep.subr.mxu0 0.0
    %85 = vmatpush2.msra.mxu0 0.0
    %86 = vmatprep.subr.mxu0 0.0
    %87 = vmatpush2.msra.mxu0 0.0
    %88 = vmatprep.subr.mxu0 0.0
    %89 = vmatpush2.msra.mxu0 0.0
    %90 = vmatprep.subr.mxu0 0.0
    %91 = vmatpush2.msra.mxu0 0.0
    %92 = vmatprep.subr.mxu0 0.0
    %93 = vmatpush2.msra.mxu0 0.0
    %94 = vmatprep.subr.mxu0 0.0
    %95 = vmatpush2.msra.mxu0 0.0
    %96 = vmatprep.subr.mxu0 0.0
    %97 = vmatpush2.msra.mxu0 0.0
    %98 = vmatprep.subr.mxu0 0.0
    %99 = vmatpush2.msra.mxu0 0.0
    %100 = vmatprep.subr.mxu0 0.0
    %101 = vmatpush2.msra.mxu0 0.0
    %102 = vmatprep.subr.mxu0 0.0
    %103 = vmatpush2.msra.mxu0 0.0
    %104 = vmatprep.subr.mxu0 0.0
    %105 = vmatpush2.msra.mxu0 0.0
    %106 = vmatprep.subr.mxu0 0.0
    %107 = vmatpush2.msra.mxu0 0.0
    %108 = vmatprep.mubr.f32.mxu0 0.0
    %109 = vmatmul.mubr.f32.gmra.mxu0 %v42
    %v110 = vpop.f32.mrf.mxu0
    %v111 = vadd.f32 %v38, %v110
    %v112 = vpop.f32.mrf.mxu0
    %113 = vdwg.mxu0
    %v114 = vmax.f32 %v111, 0.0
    %v115 = vld [vmem:[%s3] sm:$0xf]
    %v116 = vld [vmem:[%s4] sm:$0x1]
    %v118 = vlaneseq
    %v119 = vshrl.u32 %v118, 7
    %v120 = vsub.s32 0, %v119
    %v121 = vrot.slane %v116, %v120
    %vm123 = vcmask 31744
    %v125 = vsel %vm123, %v114, 0
    %vm127 = vcmask 1043456
    %v129 = vsel %vm127, %v115, 0
    %131 = vmatprep.subr.mxu0 0.0
    %132 = vmatpush1.msra.mxu0 0.0
    %133 = vmatprep.subr.mxu0 0.0
    %134 = vmatpush1.msra.mxu0 0.0
    %135 = vmatprep.subr.mxu0 0.0
    %136 = vmatpush1.msra.mxu0 0.0
    %137 = vmatprep.subr.mxu0 0.0
    %138 = vmatpush1.msra.mxu0 0.0
    %139 = vmatprep.subr.mxu0 0.0
    %140 = vmatpush1.msra.mxu0 0.0
    %141 = vmatprep.subr.mxu0 0.0
    %142 = vmatpush1.msra.mxu0 0.0
    %143 = vmatprep.subr.mxu0 0.0
    %144 = vmatpush1.msra.mxu0 0.0
    %145 = vmatprep.subr.mxu0 0.0
    %146 = vmatpush1.msra.mxu0 0.0
    %147 = vmatprep.subr.mxu0 0.0
    %148 = vmatpush1.msra.mxu0 0.0
    %149 = vmatprep.subr.mxu0 0.0
    %150 = vmatpush1.msra.mxu0 0.0
    %151 = vmatprep.subr.mxu0 0.0
    %152 = vmatpush1.msra.mxu0 0.0
    %153 = vmatprep.subr.mxu0 0.0
    %154 = vmatpush1.msra.mxu0 0.0
    %155 = vmatprep.subr.mxu0 0.0
    %156 = vmatpush1.msra.mxu0 0.0
    %157 = vmatprep.subr.mxu0 0.0
    %158 = vmatpush1.msra.mxu0 0.0
    %159 = vmatprep.subr.mxu0 0.0
    %160 = vmatpush1.msra.mxu0 0.0
    %161 = vmatprep.subr.mxu0 0.0
    %162 = vmatpush1.msra.mxu0 %v129
    %163 = vmatprep.subr.mxu0 0.0
    %164 = vmatpush2.msra.mxu0 0.0
    %165 = vmatprep.subr.mxu0 0.0
    %166 = vmatpush2.msra.mxu0 0.0
    %167 = vmatprep.subr.mxu0 0.0
    %168 = vmatpush2.msra.mxu0 0.0
    %169 = vmatprep.subr.mxu0 0.0
    %170 = vmatpush2.msra.mxu0 0.0
    %171 = vmatprep.subr.mxu0 0.0
    %172 = vmatpush2.msra.mxu0 0.0
    %173 = vmatprep.subr.mxu0 0.0
    %174 = vmatpush2.msra.mxu0 0.0
    %175 = vmatprep.subr.mxu0 0.0
    %176 = vmatpush2.msra.mxu0 0.0
    %177 = vmatprep.subr.mxu0 0.0
    %178 = vmatpush2.msra.mxu0 0.0
    %179 = vmatprep.subr.mxu0 0.0
    %180 = vmatpush2.msra.mxu0 0.0
    %181 = vmatprep.subr.mxu0 0.0
    %182 = vmatpush2.msra.mxu0 0.0
    %183 = vmatprep.subr.mxu0 0.0
    %184 = vmatpush2.msra.mxu0 0.0
    %185 = vmatprep.subr.mxu0 0.0
    %186 = vmatpush2.msra.mxu0 0.0
    %187 = vmatprep.subr.mxu0 0.0
    %188 = vmatpush2.msra.mxu0 0.0
    %189 = vmatprep.subr.mxu0 0.0
    %190 = vmatpush2.msra.mxu0 0.0
    %191 = vmatprep.subr.mxu0 0.0
    %192 = vmatpush2.msra.mxu0 0.0
    %193 = vmatprep.subr.mxu0 0.0
    %194 = vmatpush2.msra.mxu0 0.0
    %195 = vmatprep.mubr.f32.mxu0 0.0
    %196 = vmatmul.mubr.f32.gmra.mxu0 %v125
    %v197 = vpop.f32.mrf.mxu0
    %v198 = vadd.f32 %v121, %v197
    %v199 = vpop.f32.mrf.mxu0
    %200 = vdwg.mxu0
    %v201 = vxor.u32 %v198, 2147483648
    %v202 = vmul.f32 %v201, 1.442695
    %v203 = vpow.pop %v202
    %v204 = vadd.f32 %v203, 1.0
    %v205 = vrcp.pop %v204
    %v206 = vmul.f32 1.0, %v205
    %v207 = vmul.f32 %v24, %v206
    %208 = vst.msk [vmem:[#allocation2] sm:$0xff] %vm40, %v207
    %v209 = vmul.f32 %v207, %v207
    %vm210 = vcmask 261120
    %v211 = vsel %vm210, %v209, 0.0
    %212 = vadd.xlane.f32.xlu0 %v211
    %v213 = vpop.xlane.xlu0 %212
    %v214 = vrsqrt.pop %v213
    %v215 = vmul.f32 %v213, %v214
    %vm216 = vcmp.eq.f32.partialorder %v213, inf
    %v217 = vsel %vm216, %v213, %v215
    %vm218 = vcmp.eq.f32.partialorder %v213, 0.0
    %v219 = vand.u32 %v213, 2147483648
    %v220 = vsel %vm218, %v219, %v217
    %222 = vrot.lane.b32.xlu0 %v209, 96
    %v223 = vpop.permute.xlu0 %222
    %v225 = vsel %vm210, %v223, 0.0
    %226 = vadd.xlane.f32.xlu0 %v225
    %v227 = vpop.xlane.xlu0 %226
    %v228 = vrsqrt.pop %v227
    %v229 = vmul.f32 %v227, %v228
    %vm230 = vcmp.eq.f32.partialorder %v227, inf
    %v231 = vsel %vm230, %v227, %v229
    %vm232 = vcmp.eq.f32.partialorder %v227, 0.0
    %v233 = vand.u32 %v227, 2147483648
    %v234 = vsel %vm232, %v233, %v231
    %vm235 = vcmask 7168
    %v236 = vsel %vm235, %v220, %v234
    %vm237 = vcmask 15360
    %v238 = vsel %vm237, %v236, 0.0
    %v239 = vrot.slane %v238, 4
    %v240 = vadd.f32 %v238, %v239
    %v241 = vrot.slane %v240, 2
    %v242 = vadd.f32 %v240, %v241
    %v243 = vrot.slane %v242, 1
    %v244 = vadd.f32 %v242, %v243
    %v245 = vmul.f32 %v244, 0.125
    %vm246 = vcmask 8192
    %247 = vst.msk [vmem:[#allocation4] sm:$0x1] %vm246, %v245
    // Predicated region
    $region22: #{rna_block_forward.1} parent=1 // pred_check
      _
    $region23: #{rna_block_forward.1} parent=1 // pred_check_branch
      %249 = sbr.rel (0) target = $region25
    $region24: #{rna_block_forward.1} parent=1 // pred_region
      %s251 = ssub.s32 128, 128
      %252 = vsyncadd [#allocation3], %s251
      %s254 = sshll.u32 [#allocation2], 4
      %s255 = int_to_ptr.vmem [resolvable:$true] %s254
      %257 = dma.vmem_to_hbm [thread:$0]  %s255, 128, %s5, [#allocation3]
    $region25: #{rna_block_forward.1} parent=1 // pred_fallthru
      _
    // Predicated region
    $region26: #{rna_block_forward.1} parent=1 // pred_check
      _
    $region27: #{rna_block_forward.1} parent=1 // pred_check_branch
      %259 = sbr.rel (0) target = $region29
    $region28: #{rna_block_forward.1} parent=1 // pred_region
      %s261 = ssub.s32 16, 16
      %262 = vsyncadd [#allocation5], %s261
      %s264 = sshll.u32 [#allocation4], 4
      %s265 = int_to_ptr.vmem [resolvable:$true] %s264
      %267 = dma.vmem_to_hbm [thread:$0]  %s265, 16, %s6, [#allocation5]
    $region29: #{rna_block_forward.1} parent=1 // pred_fallthru
      _
    // Predicated region
    $region30: #{rna_block_forward.1} parent=1 // pred_check
      _
    $region31: #{rna_block_forward.1} parent=1 // pred_check_branch
      %269 = sbr.rel (0) target = $region33
    $region32: #{rna_block_forward.1} parent=1 // pred_region
      %270 = dma.done [#allocation3], 128
    $region33: #{rna_block_forward.1} parent=1 // pred_fallthru
      _
    // Predicated region
    $region34: #{rna_block_forward.1} parent=1 // pred_check
      _
    $region35: #{rna_block_forward.1} parent=1 // pred_check_branch
      %272 = sbr.rel (0) target = $region37
    $region36: #{rna_block_forward.1} parent=1 // pred_region
      %273 = dma.done [#allocation5], 16
    $region37: #{rna_block_forward.1} parent=1 // pred_fallthru
      _
    %274 = vsyncpa [#allocation3], 1
    %275 = vsyncpa [#allocation5], 1

</llo_original>
